<compile_context>
chip_gen: v7x
topology: tpu7x:2x2x1
jax: 0.10.0
libtpu: 0.0.40
codegen_flags: <defaults>
</compile_context>

<pallas_src>
import jax
import jax.numpy as jnp
from jax.experimental import pallas as pl
from jax.experimental.pallas import tpu as pltpu


def _pa_kernel(x_ref, w1t_ref, b1_ref, w2c_ref, b2_ref, o_ref):
    # x_ref:  (1, C, T)     channels on sublanes, pixels on lanes
    # w1t_ref:(Csub, C)     in x dtype;  b1_ref:(Csub, 1) f32
    # w2c_ref:(Csub, 1) f32; b2_ref:(1, 1) f32
    # o_ref:  (1, C, T)
    x = x_ref[0]                                              # (C, T)

    # conv1 (1x1) + ReLU: per-pixel matmul over channels (MXU, f32 accumulate).
    h = jnp.dot(w1t_ref[...], x,
                preferred_element_type=jnp.float32)           # (Csub, T) f32
    h = jnp.maximum(h + b1_ref[...], 0.0)

    # conv2 (1x1) -> one attention logit per pixel.  Tiny contraction (Cmid),
    # done as VPU scale + XLU sublane reduce to keep a lane-dense f32 row.
    y = jnp.sum(h * w2c_ref[...], axis=0, keepdims=True)      # (1, T) f32
    y = jax.nn.sigmoid(y + b2_ref[...])

    # pixel attention: broadcast (1, T) over channel sublanes; single cast.
    o_ref[0] = (x * y).astype(o_ref.dtype)


def _vmem_budget_and_limit():
    """(lane-tile VMEM budget for double-buffered x+out, vmem_limit_bytes)."""
    kind = ""
    try:
        kind = jax.devices()[0].device_kind.lower()
    except Exception:
        pass
    if "v6" in kind or "v7" in kind:
        return 24 * 1024 * 1024, 40 * 1024 * 1024   # fits v7x 64 MiB VMEM
    if "v5" in kind and ("lite" in kind or "5e" in kind):
        return 10 * 1024 * 1024, 18 * 1024 * 1024   # v5e: small scoped default
    return 12 * 1024 * 1024, 20 * 1024 * 1024       # unknown / older: safe


def _pick_lane_tile(N, C, HW, itemsize, vmem_budget_bytes, min_steps=4):
    """Pick the lane tile T.

    If HW % 128 == 0, T is the largest 128-multiple divisor of HW that fits
    the VMEM budget (so no padding / slicing is ever needed), shrunk if
    necessary so the grid has at least `min_steps` steps (megacore)."""
    # Double-buffered x + out tiles: 2 arrays * 2 buffers * C * T * itemsize.
    t_max = vmem_budget_bytes // (4 * max(C, 1) * itemsize)
    t_max = max(128, (t_max // 128) * 128)

    if HW % 128 == 0:
        base = HW // 128
        divs = [128 * d for d in range(1, base + 1) if base % d == 0]  # ascending
        fit = [t for t in divs if t <= t_max]
        t = fit[-1] if fit else 128
        if N * (HW // t) < min_steps:
            enough = [c for c in fit if N * (HW // c) >= min_steps]
            if enough:
                t = enough[-1]     # largest tile that still gives enough steps
        return t

    # HW not lane-aligned: prefer the full extent (no padding) when it fits.
    if HW <= t_max:
        return HW
    return t_max   # padding path (only case that still pads)


def pa_layer(x_nchw, w1, b1, w2, b2, *, lane_tile=None):
    """x_nchw: (N, C, H, W).  w1: (C, Cmid), b1: (Cmid,), w2: (Cmid, 1), b2: (1,).
    (w1/w2 are the torch Conv2d weights (Cout, Cin, 1, 1) reshaped to (Cin, Cout).)"""
    N, C, H, W = x_nchw.shape
    Cmid = w1.shape[1]
    HW = H * W
    itemsize = jnp.dtype(x_nchw.dtype).itemsize

    budget, vmem_limit = _vmem_budget_and_limit()
    T = lane_tile if lane_tile is not None else _pick_lane_tile(
        N, C, HW, itemsize, budget)

    # Free reshape: NCHW -> (N, C, H*W). No transposes, no data movement.
    x3 = x_nchw.reshape(N, C, HW)
    HW_pad = pl.cdiv(HW, T) * T
    if HW_pad != HW:               # only hit when HW % 128 != 0 and HW > t_max
        x3 = jnp.pad(x3, ((0, 0), (0, 0), (0, HW_pad - HW)))

    # Pad Cmid up to a full sublane tile; zero rows stay zero through ReLU and
    # (with zero w2 rows) contribute nothing to the second conv.
    sub = 8 if itemsize >= 4 else 16
    Csub = pl.cdiv(Cmid, sub) * sub

    w1t = jnp.zeros((Csub, C), x_nchw.dtype).at[:Cmid, :].set(
        w1.T.astype(x_nchw.dtype))                      # (Csub, C), MXU operand
    b1c = jnp.zeros((Csub, 1), jnp.float32).at[:Cmid, :].set(
        b1.reshape(Cmid, 1).astype(jnp.float32))        # column bias
    w2c = jnp.zeros((Csub, 1), jnp.float32).at[:Cmid, :].set(
        w2.reshape(Cmid, 1).astype(jnp.float32))        # column weights
    b2c = b2.reshape(1, 1).astype(jnp.float32)

    grid = (N, HW_pad // T)

    out3 = pl.pallas_call(
        _pa_kernel,
        out_shape=jax.ShapeDtypeStruct((N, C, HW_pad), x_nchw.dtype),
        grid_spec=pltpu.PrefetchScalarGridSpec(
            num_scalar_prefetch=0,
            grid=grid,
            in_specs=[
                pl.BlockSpec((1, C, T), lambda n, t: (n, 0, t)),   # x tile
                pl.BlockSpec((Csub, C), lambda n, t: (0, 0)),      # w1^T (full)
                pl.BlockSpec((Csub, 1), lambda n, t: (0, 0)),      # b1
                pl.BlockSpec((Csub, 1), lambda n, t: (0, 0)),      # w2 column
                pl.BlockSpec((1, 1), lambda n, t: (0, 0)),         # b2
            ],
            out_specs=pl.BlockSpec((1, C, T), lambda n, t: (n, 0, t)),
        ),
        compiler_params=pltpu.CompilerParams(
            dimension_semantics=("parallel", "parallel"),
            vmem_limit_bytes=vmem_limit),
    )(x3, w1t, b1c, w2c, b2c)

    if HW_pad != HW:
        out3 = out3[:, :, :HW]
    return out3.reshape(N, C, H, W)


def pa_layer_ref(x_nchw, w1, b1, w2, b2):
    """Pure-JAX reference with identical semantics (for verification)."""
    xf = jnp.transpose(x_nchw, (0, 2, 3, 1)).astype(jnp.float32)   # NHWC
    h = jnp.maximum(xf @ w1 + b1, 0.0)
    y = jax.nn.sigmoid(h @ w2 + b2)
    out = xf * y
    return jnp.transpose(out, (0, 3, 1, 2)).astype(x_nchw.dtype)


if __name__ == "__main__":
    key = jax.random.PRNGKey(0)
    k_x, k_w1, k_b1, k_w2, k_b2 = jax.random.split(key, 5)

    # PALayer(channel=32): conv1 32->4 (1x1), conv2 4->1 (1x1)
    N, C, H, W = 2, 32, 16, 16
    Cmid = C // 8

    x = jax.random.normal(k_x, (N, C, H, W), dtype=jnp.float32)
    # torch Conv2d weight (Cout, Cin, 1, 1) -> matmul weight (Cin, Cout)
    w1 = jax.random.normal(k_w1, (C, Cmid), dtype=jnp.float32) * 0.1
    b1 = jax.random.normal(k_b1, (Cmid,), dtype=jnp.float32) * 0.1
    w2 = jax.random.normal(k_w2, (Cmid, 1), dtype=jnp.float32) * 0.1
    b2 = jax.random.normal(k_b2, (1,), dtype=jnp.float32) * 0.1

    out = pa_layer(x, w1, b1, w2, b2)
    out = jax.block_until_ready(out)

    ref = pa_layer_ref(x, w1, b1, w2, b2)
    assert out.shape == x.shape and out.dtype == x.dtype
    assert jnp.allclose(out, ref, atol=1e-5, rtol=1e-5)

    print("KERNEL_OK")
</pallas_src>

<mosaic_0001>
module attributes {stable_mosaic.version = 11 : i64} {
  func.func @_pa_kernel(%arg0: i32, %arg1: i32, %arg2: memref<1x32x128xf32, #tpu.memory_space<vmem>>, %arg3: memref<8x32xf32, #tpu.memory_space<vmem>>, %arg4: memref<8x1xf32, #tpu.memory_space<vmem>>, %arg5: memref<8x1xf32, #tpu.memory_space<vmem>>, %arg6: memref<1x1xf32, #tpu.memory_space<vmem>>, %arg7: memref<1x32x128xf32, #tpu.memory_space<vmem>>) attributes {dimension_semantics = [#tpu.dimension_semantics<parallel>, #tpu.dimension_semantics<parallel>], iteration_bounds = array<i64: 2, 2>, scalar_prefetch = 0 : i64, scratch_operands = 0 : i64, tpu.core_type = #tpu.core_type<tc>, window_params = [{transform_indices = @transform_0, window_bounds = array<i64: 1, 32, 128>}, {pipeline_mode = #tpu.pipeline_mode<synchronous>, transform_indices = @transform_1, window_bounds = array<i64: 8, 32>}, {pipeline_mode = #tpu.pipeline_mode<synchronous>, transform_indices = @transform_2, window_bounds = array<i64: 8, 1>}, {pipeline_mode = #tpu.pipeline_mode<synchronous>, transform_indices = @transform_3, window_bounds = array<i64: 8, 1>}, {pipeline_mode = #tpu.pipeline_mode<synchronous>, transform_indices = @transform_4, window_bounds = array<i64: 1, 1>}, {transform_indices = @transform_5, window_bounds = array<i64: 1, 32, 128>}]} {
    %c0 = arith.constant 0 : index
    %c0_0 = arith.constant 0 : index
    %c0_1 = arith.constant 0 : index
    %0 = vector.load %arg2[%c0, %c0_0, %c0_1] : memref<1x32x128xf32, #tpu.memory_space<vmem>>, vector<1x32x128xf32>
    %1 = vector.shape_cast %0 : vector<1x32x128xf32> to vector<32x128xf32>
    %c0_2 = arith.constant 0 : index
    %c0_3 = arith.constant 0 : index
    %2 = vector.load %arg3[%c0_2, %c0_3] : memref<8x32xf32, #tpu.memory_space<vmem>>, vector<8x32xf32>
    %cst = arith.constant dense<0.000000e+00> : vector<8x128xf32>
    %3 = tpu.matmul %2, %1, %cst {dimension_numbers = #tpu.dot_dimension_numbers<[1], [0], [0], [1], [0, 0, 1, 1], [], []>} : vector<8x32xf32>, vector<32x128xf32>, vector<8x128xf32> -> vector<8x128xf32>
    %c0_4 = arith.constant 0 : index
    %c0_5 = arith.constant 0 : index
    %4 = vector.load %arg4[%c0_4, %c0_5] : memref<8x1xf32, #tpu.memory_space<vmem>>, vector<8x1xf32>
    %5 = vector.broadcast %4 : vector<8x1xf32> to vector<8x128xf32>
    %6 = arith.addf %3, %5 : vector<8x128xf32>
    %cst_6 = arith.constant 0.000000e+00 : f32
    %7 = vector.broadcast %cst_6 : f32 to vector<8x128xf32>
    %8 = arith.maximumf %6, %7 : vector<8x128xf32>
    %c0_7 = arith.constant 0 : index
    %c0_8 = arith.constant 0 : index
    %9 = vector.load %arg5[%c0_7, %c0_8] : memref<8x1xf32, #tpu.memory_space<vmem>>, vector<8x1xf32>
    %10 = vector.broadcast %9 : vector<8x1xf32> to vector<8x128xf32>
    %11 = arith.mulf %8, %10 : vector<8x128xf32>
    %cst_9 = arith.constant dense<0.000000e+00> : vector<128xf32>
    %12 = vector.multi_reduction <add>, %11, %cst_9 [0] : vector<8x128xf32> to vector<128xf32>
    %13 = vector.shape_cast %12 : vector<128xf32> to vector<1x128xf32>
    %c0_10 = arith.constant 0 : index
    %c0_11 = arith.constant 0 : index
    %14 = vector.load %arg6[%c0_10, %c0_11] : memref<1x1xf32, #tpu.memory_space<vmem>>, vector<1x1xf32>
    %15 = vector.broadcast %14 : vector<1x1xf32> to vector<1x128xf32>
    %16 = arith.addf %13, %15 : vector<1x128xf32>
    %17 = arith.negf %16 : vector<1x128xf32>
    %18 = math.exp %17 : vector<1x128xf32>
    %cst_12 = arith.constant 1.000000e+00 : f32
    %19 = vector.broadcast %cst_12 : f32 to vector<1x128xf32>
    %20 = arith.addf %19, %18 : vector<1x128xf32>
    %21 = arith.divf %19, %20 : vector<1x128xf32>
    %22 = vector.broadcast %21 : vector<1x128xf32> to vector<32x128xf32>
    %23 = arith.mulf %1, %22 : vector<32x128xf32>
    %c0_13 = arith.constant 0 : index
    %c0_14 = arith.constant 0 : index
    %c0_15 = arith.constant 0 : index
    %24 = vector.load %arg7[%c0_13, %c0_14, %c0_15] : memref<1x32x128xf32, #tpu.memory_space<vmem>>, vector<1x32x128xf32>
    %25 = vector.shape_cast %24 : vector<1x32x128xf32> to vector<32x128xf32>
    %26 = vector.shape_cast %23 : vector<32x128xf32> to vector<1x32x128xf32>
    tpu.vector_store %arg7[%c0_13, %c0_14, %c0_15], %26 {strides = array<i32>} : memref<1x32x128xf32, #tpu.memory_space<vmem>>, vector<1x32x128xf32>,
    return
  }
  func.func @transform_0(%arg0: i32, %arg1: i32) -> (i32, i32, i32) {
    %c0_i32 = arith.constant 0 : i32
    %c0_i32_0 = arith.constant 0 : i32
    return %arg0, %c0_i32, %arg1 : i32, i32, i32
  }
  func.func @transform_1(%arg0: i32, %arg1: i32) -> (i32, i32) {
    %c0_i32 = arith.constant 0 : i32
    %c0_i32_0 = arith.constant 0 : i32
    %c0_i32_1 = arith.constant 0 : i32
    return %c0_i32, %c0_i32_0 : i32, i32
  }
  func.func @transform_2(%arg0: i32, %arg1: i32) -> (i32, i32) {
    %c0_i32 = arith.constant 0 : i32
    %c0_i32_0 = arith.constant 0 : i32
    %c0_i32_1 = arith.constant 0 : i32
    return %c0_i32, %c0_i32_0 : i32, i32
  }
  func.func @transform_3(%arg0: i32, %arg1: i32) -> (i32, i32) {
    %c0_i32 = arith.constant 0 : i32
    %c0_i32_0 = arith.constant 0 : i32
    %c0_i32_1 = arith.constant 0 : i32
    return %c0_i32, %c0_i32_0 : i32, i32
  }
  func.func @transform_4(%arg0: i32, %arg1: i32) -> (i32, i32) {
    %c0_i32 = arith.constant 0 : i32
    %c0_i32_0 = arith.constant 0 : i32
    %c0_i32_1 = arith.constant 0 : i32
    return %c0_i32, %c0_i32_0 : i32, i32
  }
  func.func @transform_5(%arg0: i32, %arg1: i32) -> (i32, i32, i32) {
    %c0_i32 = arith.constant 0 : i32
    %c0_i32_0 = arith.constant 0 : i32
    return %arg0, %c0_i32, %arg1 : i32, i32, i32
  }
}

</mosaic_0001>

<llo_original>
// kernel: tpu_custom_call.1
$region0: #{tpu_custom_call.1}
  #allocation0 [shape = 'u32[]', space=smem, size = 0x4, offset = 0x4, fixed_abs, tag = 'smem constant byte address 0x4 - core index']
  #allocation1 [shape = 'u32[144,128]{1,0:T(1,128)}', space=vmem, size = 0x12000, scoped, tag = 'internal scratch']
  #allocation2 [shape = 'f32[1,1]{1,0:T(1,128)S(1)}', space=vmem, size = 0x200, scoped, tag = 'scoped memory for tpu_custom_call.1']
  %s0 = inlined_call_operand.hbm [shape: f32[2,32,256], index: 0, kind: input, shape index: {}]
  %s1 = inlined_call_operand.vmem [shape: f32[8,32], index: 1, kind: input, shape index: {}]
  %s2 = inlined_call_operand.vmem [shape: f32[8,1], index: 2, kind: input, shape index: {}]
  %s3 = inlined_call_operand.vmem [shape: f32[8,1], index: 3, kind: input, shape index: {}]
  %s4 = inlined_call_operand.<no memory space> [shape: f32[1,1], index: 4, kind: input, shape index: {}]
  %s5 = inlined_call_operand.hbm [shape: f32[2,32,256], index: 5, kind: output, shape index: {}]
  %s6 = sld [smem:[#allocation0]]
  $region57: #{tpu_custom_call.1} parent=0
    _
  %s8 = ssub.s32 1, %s6
  %s9 = scalar_select 0, %s8, %s6
  %v10 = vstv %s4
  %11 = vst [vmem:[#allocation2] sm:$0x1] %v10
  $region1: #{tpu_custom_call.1} parent=0
    #allocation3 [shape = 'u8[32768]{0}', space=vmem, size = 0x8000, scoped, tag = 'input window, operand 0']
    #allocation4 [shape = 's32[2]{0}', space=sflag, size = 0x8, scoped, tag = 'scoped memory for tpu_custom_call.1']
    #allocation5 [shape = 's32[2]{0}', space=sflag, size = 0x8, scoped, tag = 'scoped memory for tpu_custom_call.1']
    #allocation6 [shape = 'u8[32768]{0}', space=vmem, size = 0x8000, scoped, tag = 'output window, operand 0']
    %12 = vsyncpa [#allocation4], 0
    %s13 = scalar_lea.sflag [#allocation4], 1
    %14 = vsyncpa %s13, 0
    %15 = vsyncpa [#allocation5], 0
    %s16 = scalar_lea.sflag [#allocation5], 1
    %17 = vsyncpa %s16, 0
    loop: start=0, step=1, limit=6
    $region2: #{tpu_custom_call.1} parent=1 // loop_pre_header
      _
    $region3: #{tpu_custom_call.1} parent=1 // loop_header
      %s19 = sphi 0, %s23
      %p20 = scmp.ge.s32.totalorder %s19, 6
      %s26 = sphi 0, %s38
      %s27 = sphi 0, %s34
      %s28 = sphi 0, %s26
      %s29 = sphi 0, %s27
      %s30 = sphi 0, %s28
      %s31 = sphi 0, %s29
      %s43 = sphi 0, %s45
      %s46 = sphi 0, %s43
      %s47 = sphi 0, %s46
      %s63 = sphi 0, %s47
      %s67 = sphi 0, %s67
      %s69 = sphi 0, %s67
      %s70 = sphi 0, %s69
      %s84 = sphi 0, %s70
      %s88 = sphi 0, %s88
      %s90 = sphi 0, %s88
      %s91 = sphi 0, %s90
      %s105 = sphi 0, %s91
      %s109 = sphi 0, %s109
      %s111 = sphi 0, %s109
      %s112 = sphi 0, %s111
      %s126 = sphi 0, %s112
      %s130 = sphi 0, %s130
      %s132 = sphi 0, %s130
      %s133 = sphi 0, %s132
      %s147 = sphi 0, %s133
      %s155 = sphi 0, %s157
      %s158 = sphi 0, %s155
      %s159 = sphi 0, %s158
      %s175 = sphi 0, %s159
    $region4: #{tpu_custom_call.1} parent=1 // loop_header_branch
      %22 = sbr.rel (%p20) target = $region8
    $region5: #{tpu_custom_call.1} parent=1 // loop_body
      %s24 = ssub.s32 %s19, 1
      %s25 = ssub.s32 %s19, 2
      %s32 = sadd.s32 1, %s27
      %p33 = scmp.ge.s32.totalorder %s32, 2
      %s34 = scalar_select %p33, 0, %s32
      %s35 = sadd.s32 1, %s26
      %s36 = scalar_select %p33, %s35, %s26
      %p37 = scmp.ge.s32.totalorder %s36, 2
      %s38 = scalar_select %p37, 0, %s36
      %s39 = ssub.s32 %s26, %s38
      %s40 = ssub.s32 %s27, %s34
      %s41 = sor.u32 %s39, %s40
      %p42 = scmp.eq.s32.totalorder %s41, 0
      %s44 = sadd.s32 %s43, 1
      %s45 = scalar_select %p42, %s43, %s44
      %p48 = pneg %p42
      %p49 = scmp.eq.s32.totalorder %s19, 3
      %p50 = por %p48, %p49
      %p51 = scmp.ne.s32.totalorder %s43, %s46
      %p52 = scmp.eq.s32.totalorder %s19, 0
      %p53 = por %p51, %p52
      %p54 = scmp.ne.s32.totalorder %s43, %s46
      %p55 = scmp.eq.s32.totalorder %s24, 3
      %p56 = por %p54, %p55
      %p57 = scmp.ne.s32.totalorder %s46, %s47
      %p58 = scmp.eq.s32.totalorder %s24, 0
      %p59 = por %p57, %p58
      %p60 = scmp.ne.s32.totalorder %s46, %s47
      %p61 = scmp.eq.s32.totalorder %s25, 3
      %p62 = por %p60, %p61
      %p64 = scmp.ne.s32.totalorder %s47, %s63
      %p65 = scmp.eq.s32.totalorder %s25, 0
      %p66 = por %p64, %p65
      %s68 = sadd.s32 %s67, 1
      %p71 = scmp.eq.s32.totalorder %s19, 3
      %p72 = scmp.ne.s32.totalorder %s67, %s69
      %p73 = scmp.eq.s32.totalorder %s19, 0
      %p74 = por %p72, %p73
      %p75 = scmp.ne.s32.totalorder %s67, %s69
      %p76 = scmp.eq.s32.totalorder %s24, 3
      %p77 = por %p75, %p76
      %p78 = scmp.ne.s32.totalorder %s69, %s70
      %p79 = scmp.eq.s32.totalorder %s24, 0
      %p80 = por %p78, %p79
      %p81 = scmp.ne.s32.totalorder %s69, %s70
      %p82 = scmp.eq.s32.totalorder %s25, 3
      %p83 = por %p81, %p82
      %p85 = scmp.ne.s32.totalorder %s70, %s84
      %p86 = scmp.eq.s32.totalorder %s25, 0
      %p87 = por %p85, %p86
      %s89 = sadd.s32 %s88, 1
      %p92 = scmp.eq.s32.totalorder %s19, 3
      %p93 = scmp.ne.s32.totalorder %s88, %s90
      %p94 = scmp.eq.s32.totalorder %s19, 0
      %p95 = por %p93, %p94
      %p96 = scmp.ne.s32.totalorder %s88, %s90
      %p97 = scmp.eq.s32.totalorder %s24, 3
      %p98 = por %p96, %p97
      %p99 = scmp.ne.s32.totalorder %s90, %s91
      %p100 = scmp.eq.s32.totalorder %s24, 0
      %p101 = por %p99, %p100
      %p102 = scmp.ne.s32.totalorder %s90, %s91
      %p103 = scmp.eq.s32.totalorder %s25, 3
      %p104 = por %p102, %p103
      %p106 = scmp.ne.s32.totalorder %s91, %s105
      %p107 = scmp.eq.s32.totalorder %s25, 0
      %p108 = por %p106, %p107
      %s110 = sadd.s32 %s109, 1
      %p113 = scmp.eq.s32.totalorder %s19, 3
      %p114 = scmp.ne.s32.totalorder %s109, %s111
      %p115 = scmp.eq.s32.totalorder %s19, 0
      %p116 = por %p114, %p115
      %p117 = scmp.ne.s32.totalorder %s109, %s111
      %p118 = scmp.eq.s32.totalorder %s24, 3
      %p119 = por %p117, %p118
      %p120 = scmp.ne.s32.totalorder %s111, %s112
      %p121 = scmp.eq.s32.totalorder %s24, 0
      %p122 = por %p120, %p121
      %p123 = scmp.ne.s32.totalorder %s111, %s112
      %p124 = scmp.eq.s32.totalorder %s25, 3
      %p125 = por %p123, %p124
      %p127 = scmp.ne.s32.totalorder %s112, %s126
      %p128 = scmp.eq.s32.totalorder %s25, 0
      %p129 = por %p127, %p128
      %s131 = sadd.s32 %s130, 1
      %p134 = scmp.eq.s32.totalorder %s19, 3
      %p135 = scmp.ne.s32.totalorder %s130, %s132
      %p136 = scmp.eq.s32.totalorder %s19, 0
      %p137 = por %p135, %p136
      %p138 = scmp.ne.s32.totalorder %s130, %s132
      %p139 = scmp.eq.s32.totalorder %s24, 3
      %p140 = por %p138, %p139
      %p141 = scmp.ne.s32.totalorder %s132, %s133
      %p142 = scmp.eq.s32.totalorder %s24, 0
      %p143 = por %p141, %p142
      %p144 = scmp.ne.s32.totalorder %s132, %s133
      %p145 = scmp.eq.s32.totalorder %s25, 3
      %p146 = por %p144, %p145
      %p148 = scmp.ne.s32.totalorder %s133, %s147
      %p149 = scmp.eq.s32.totalorder %s25, 0
      %p150 = por %p148, %p149
      %s151 = ssub.s32 %s26, %s38
      %s152 = ssub.s32 %s27, %s34
      %s153 = sor.u32 %s151, %s152
      %p154 = scmp.eq.s32.totalorder %s153, 0
      %s156 = sadd.s32 %s155, 1
      %s157 = scalar_select %p154, %s155, %s156
      %p160 = pneg %p154
      %p161 = scmp.eq.s32.totalorder %s19, 3
      %p162 = por %p160, %p161
      %p163 = scmp.ne.s32.totalorder %s155, %s158
      %p164 = scmp.eq.s32.totalorder %s19, 0
      %p165 = por %p163, %p164
      %p166 = scmp.ne.s32.totalorder %s155, %s158
      %p167 = scmp.eq.s32.totalorder %s24, 3
      %p168 = por %p166, %p167
      %p169 = scmp.ne.s32.totalorder %s158, %s159
      %p170 = scmp.eq.s32.totalorder %s24, 0
      %p171 = por %p169, %p170
      %p172 = scmp.ne.s32.totalorder %s158, %s159
      %p173 = scmp.eq.s32.totalorder %s25, 3
      %p174 = por %p172, %p173
      %p176 = scmp.ne.s32.totalorder %s159, %s175
      %p177 = scmp.eq.s32.totalorder %s25, 0
      %p178 = por %p176, %p177
      %p179 = scmp.le.s32.totalorder 1, %s19
      %p180 = scmp.lt.s32.totalorder %s19, 5
      %p181 = pnand %p179, %p180
      %p182 = pneg %p181
      // Predicated region
      $region9: #{tpu_custom_call.1} parent=5 // pred_check
        _
      $region10: #{tpu_custom_call.1} parent=5 // pred_check_branch
        %184 = sbr.rel (%p181) target = $region12
      $region11: #{tpu_custom_call.1} parent=5 // pred_region
        %s185 = ssub.s32 %s19, 1
        // Predicated region
        $region13: #{tpu_custom_call.1} parent=11 // pred_check
          %p186 = pneg %p80
        $region14: #{tpu_custom_call.1} parent=11 // pred_check_branch
          %188 = sbr.rel (%p186) target = $region16
        $region15: #{tpu_custom_call.1} parent=11 // pred_region
          _
        $region16: #{tpu_custom_call.1} parent=11 // pred_fallthru
          _
        // Predicated region
        $region17: #{tpu_custom_call.1} parent=11 // pred_check
          %p189 = pneg %p101
        $region18: #{tpu_custom_call.1} parent=11 // pred_check_branch
          %191 = sbr.rel (%p189) target = $region20
        $region19: #{tpu_custom_call.1} parent=11 // pred_region
          _
        $region20: #{tpu_custom_call.1} parent=11 // pred_fallthru
          _
        // Predicated region
        $region21: #{tpu_custom_call.1} parent=11 // pred_check
          %p192 = pneg %p122
        $region22: #{tpu_custom_call.1} parent=11 // pred_check_branch
          %194 = sbr.rel (%p192) target = $region24
        $region23: #{tpu_custom_call.1} parent=11 // pred_region
          _
        $region24: #{tpu_custom_call.1} parent=11 // pred_fallthru
          _
        // Predicated region
        $region25: #{tpu_custom_call.1} parent=11 // pred_check
          %p195 = pneg %p143
        $region26: #{tpu_custom_call.1} parent=11 // pred_check_branch
          %197 = sbr.rel (%p195) target = $region28
        $region27: #{tpu_custom_call.1} parent=11 // pred_region
          _
        $region28: #{tpu_custom_call.1} parent=11 // pred_fallthru
          _
      $region12: #{tpu_custom_call.1} parent=5 // pred_fallthru
        _
      %p198 = scmp.lt.s32.totalorder %s19, 4
      // Predicated region
      $region29: #{tpu_custom_call.1} parent=5 // pred_check
        %p199 = pneg %p198
      $region30: #{tpu_custom_call.1} parent=5 // pred_check_branch
        %201 = sbr.rel (%p199) target = $region32
      $region31: #{tpu_custom_call.1} parent=5 // pred_region
        // Predicated region
        $region33: #{tpu_custom_call.1} parent=31 // pred_check
          %p202 = pneg %p53
        $region34: #{tpu_custom_call.1} parent=31 // pred_check_branch
          %204 = sbr.rel (%p202) target = $region36
        $region35: #{tpu_custom_call.1} parent=31 // pred_region
          %s205 = sand.u32 %s43, 1
          %s206 = scalar_lea.sflag [#allocation4], %s205
          %s207 = sand.u32 %s43, 1
          %s208 = smul.addr %s207, 32
          %s209 = scalar_lea.vmem [#allocation3], %s208
          %s211 = ssub.s32 512, 512
          %212 = vsyncadd %s206, %s211
          %s213 = smul.addr %s26, 8
          %s214 = sadd.s32 %s27, %s213
          %s215 = smul.addr %s214, 128
          %s216 = scalar_lea.hbm %s0, %s215
          %s217 = sshll.u32 %s209, 4
          %s218 = int_to_ptr.vmem [resolvable:$true] %s217
          %223 = dma.hbm_to_vmem [thread:$0]  %s216, 512, %s218, %s206, 256, 128, 8
        $region36: #{tpu_custom_call.1} parent=31 // pred_fallthru
          _
      $region32: #{tpu_custom_call.1} parent=5 // pred_fallthru
        _
      %p224 = scmp.le.s32.totalorder 1, %s19
      %p225 = scmp.lt.s32.totalorder %s19, 5
      %p226 = pnand %p224, %p225
      %p227 = pneg %p226
      // Predicated region
      $region37: #{tpu_custom_call.1} parent=5 // pred_check
        _
      $region38: #{tpu_custom_call.1} parent=5 // pred_check_branch
        %229 = sbr.rel (%p226) target = $region40
      $region39: #{tpu_custom_call.1} parent=5 // pred_region
        %s230 = ssub.s32 %s19, 1
        %s231 = sand.u32 %s46, 1
        %s232 = scalar_lea.sflag [#allocation4], %s231
        %s233 = sand.u32 %s46, 1
        %s234 = smul.addr %s233, 32
        %s235 = scalar_lea.vmem [#allocation3], %s234
        // Predicated region
        $region41: #{tpu_custom_call.1} parent=39 // pred_check
          %p236 = pneg %p59
        $region42: #{tpu_custom_call.1} parent=39 // pred_check_branch
          %238 = sbr.rel (%p236) target = $region44
        $region43: #{tpu_custom_call.1} parent=39 // pred_region
          %239 = dma.done %s232, 512
        $region44: #{tpu_custom_call.1} parent=39 // pred_fallthru
          _
        %s240 = sand.u32 %s46, 1
        %s241 = scalar_lea.sflag [#allocation4], %s240
        %s242 = sand.u32 %s46, 1
        %s243 = smul.addr %s242, 32
        %s244 = scalar_lea.vmem [#allocation3], %s243
        %p245 = pneg %p59
        %p246 = pneg %p56
        %p247 = pneg %p80
        %p248 = pneg %p77
        %p249 = pneg %p101
        %p250 = pneg %p98
        %p251 = pneg %p122
        %p252 = pneg %p119
        %p253 = pneg %p143
        %p254 = pneg %p140
        %p255 = pneg %p171
        %p256 = pneg %p168
        %s257 = sand.u32 %s158, 1
        %s258 = scalar_lea.sflag [#allocation5], %s257
        %s259 = sand.u32 %s158, 1
        %s260 = smul.addr %s259, 32
        %s261 = scalar_lea.vmem [#allocation6], %s260
        %v262 = vld [vmem:[%s235] sm:$0xff]
        %v263 = vld [vmem:[%s235 + $0x8] sm:$0xff]
        %v264 = vld [vmem:[%s235 + $0x10] sm:$0xff]
        %v265 = vld [vmem:[%s235 + $0x18] sm:$0xff]
        %v266 = vld [vmem:[%s1] sm:$0xff]
        %v267 = vld [vmem:[%s2] sm:$0xff]
        %269 = vset.pattern.permute.xlu0 0
        %270 = vperm.xlu0 %269, %v267
        %v271 = vpop.permute.xlu0 %270
        %vm273 = vcmask 261120
        %v275 = vsel %vm273, %v266, 0
        %277 = vmatprep.subr.mxu0 0.0
        %278 = vmatpush1.msra.mxu0 %v262
        %279 = vmatprep.subr.mxu0 0.0
        %280 = vmatpush1.msra.mxu0 %v263
        %281 = vmatprep.subr.mxu0 0.0
        %282 = vmatpush1.msra.mxu0 %v264
        %283 = vmatprep.subr.mxu0 0.0
        %284 = vmatpush1.msra.mxu0 %v265
        %285 = vmatprep.subr.mxu0 0.0
        %286 = vmatpush1.msra.mxu0 0.0
        %287 = vmatprep.subr.mxu0 0.0
        %288 = vmatpush1.msra.mxu0 0.0
        %289 = vmatprep.subr.mxu0 0.0
        %290 = vmatpush1.msra.mxu0 0.0
        %291 = vmatprep.subr.mxu0 0.0
        %292 = vmatpush1.msra.mxu0 0.0
        %293 = vmatprep.subr.mxu0 0.0
        %294 = vmatpush1.msra.mxu0 0.0
        %295 = vmatprep.subr.mxu0 0.0
        %296 = vmatpush1.msra.mxu0 0.0
        %297 = vmatprep.subr.mxu0 0.0
        %298 = vmatpush1.msra.mxu0 0.0
        %299 = vmatprep.subr.mxu0 0.0
        %300 = vmatpush1.msra.mxu0 0.0
        %301 = vmatprep.subr.mxu0 0.0
        %302 = vmatpush1.msra.mxu0 0.0
        %303 = vmatprep.subr.mxu0 0.0
        %304 = vmatpush1.msra.mxu0 0.0
        %305 = vmatprep.subr.mxu0 0.0
        %306 = vmatpush1.msra.mxu0 0.0
        %307 = vmatprep.subr.mxu0 0.0
        %308 = vmatpush1.msra.mxu0 0.0
        %309 = vmatprep.subr.mxu0 0.0
        %310 = vmatpush1.msra.mxu0 0.0
        %311 = vmatprep.subr.mxu0 0.0
        %312 = vmatpush1.msra.mxu0 0.0
        %313 = vmatprep.subr.mxu0 0.0
        %314 = vmatpush1.msra.mxu0 0.0
        %315 = vmatprep.subr.mxu0 0.0
        %316 = vmatpush1.msra.mxu0 0.0
        %317 = vmatprep.subr.mxu0 0.0
        %318 = vmatpush1.msra.mxu0 0.0
        %319 = vmatprep.subr.mxu0 0.0
        %320 = vmatpush1.msra.mxu0 0.0
        %321 = vmatprep.subr.mxu0 0.0
        %322 = vmatpush1.msra.mxu0 0.0
        %323 = vmatprep.subr.mxu0 0.0
        %324 = vmatpush1.msra.mxu0 0.0
        %325 = vmatprep.subr.mxu0 0.0
        %326 = vmatpush1.msra.mxu0 0.0
        %327 = vmatprep.subr.mxu0 0.0
        %328 = vmatpush1.msra.mxu0 0.0
        %329 = vmatprep.subr.mxu0 0.0
        %330 = vmatpush1.msra.mxu0 0.0
        %331 = vmatprep.subr.mxu0 0.0
        %332 = vmatpush1.msra.mxu0 0.0
        %333 = vmatprep.subr.mxu0 0.0
        %334 = vmatpush1.msra.mxu0 0.0
        %335 = vmatprep.subr.mxu0 0.0
        %336 = vmatpush1.msra.mxu0 0.0
        %337 = vmatprep.subr.mxu0 0.0
        %338 = vmatpush1.msra.mxu0 0.0
        %339 = vmatprep.subr.mxu0 0.0
        %340 = vmatpush1.msra.mxu0 0.0
        %341 = vmatprep.mubr.f32.mxu0 0.0
        %342 = vmatmul.mubr.f32.gmra.mrb[0].mxu0 %v275
        %v343 = vpop.f32.mrb[0].mxu0
        %v344 = vadd.f32 %v271, %v343
        %v345 = vpop.f32.mrb[0].mxu0
        %346 = vdwg.mxu0
        %v347 = vmax.f32 %v344, 0.0
        %v348 = vld [vmem:[%s3] sm:$0xff]
        %350 = vset.pattern.permute.xlu0 0
        %351 = vperm.xlu0 %350, %v348
        %v352 = vpop.permute.xlu0 %351
        %v354 = vmul.f32 %v347, %v352
        %v355 = vrot.slane %v354, 4
        %v356 = vadd.f32 %v354, %v355
        %v357 = vrot.slane %v356, 2
        %v358 = vadd.f32 %v356, %v357
        %v359 = vrot.slane %v358, 1
        %v360 = vadd.f32 %v358, %v359
        %v361 = vld [vmem:[#allocation2] sm:$0x1]
        %363 = vset.pattern.permute.xlu0 0
        %364 = vperm.xlu0 %363, %v361
        %v365 = vpop.permute.xlu0 %364
        %v367 = vlaneseq
        %v368 = vshrl.u32 %v367, 7
        %v369 = vsub.s32 0, %v368
        %v370 = vrot.slane %v365, %v369
        %v371 = vadd.f32 %v360, %v370
        %v372 = vxor.u32 %v371, 2147483648
        %v373 = vmul.f32 %v372, 1.442695
        %v374 = vpow.pop %v373
        %v375 = vadd.f32 %v374, 1.0
        %v376 = vrcp.pop %v375
        %v377 = vmul.f32 1.0, %v376
        %v378 = vmul.f32 %v262, %v377
        %v379 = vmul.f32 %v263, %v377
        %v380 = vmul.f32 %v264, %v377
        %v381 = vmul.f32 %v265, %v377
        %382 = vst [vmem:[%s261] sm:$0xff] %v378
        %383 = vst [vmem:[%s261 + $0x8] sm:$0xff] %v379
        %384 = vst [vmem:[%s261 + $0x10] sm:$0xff] %v380
        %385 = vst [vmem:[%s261 + $0x18] sm:$0xff] %v381
        %s386 = sand.u32 %s158, 1
        %s387 = scalar_lea.sflag [#allocation5], %s386
        %s388 = sand.u32 %s158, 1
        %s389 = smul.addr %s388, 32
        %s390 = scalar_lea.vmem [#allocation6], %s389
        // Predicated region
        $region45: #{tpu_custom_call.1} parent=39 // pred_check
          %p391 = pneg %p168
        $region46: #{tpu_custom_call.1} parent=39 // pred_check_branch
          %393 = sbr.rel (%p391) target = $region48
        $region47: #{tpu_custom_call.1} parent=39 // pred_region
          %s395 = ssub.s32 512, 512
          %396 = vsyncadd %s387, %s395
          %s397 = smul.addr %s28, 8
          %s398 = sadd.s32 %s29, %s397
          %s399 = smul.addr %s398, 128
          %s400 = scalar_lea.hbm %s5, %s399
          %s401 = sshll.u32 %s390, 4
          %s402 = int_to_ptr.vmem [resolvable:$true] %s401
          %407 = dma.vmem_to_hbm [thread:$0]  %s402, 512, %s400, %s387, 128, 256, 8
        $region48: #{tpu_custom_call.1} parent=39 // pred_fallthru
          _
      $region40: #{tpu_custom_call.1} parent=5 // pred_fallthru
        _
      %p408 = scmp.le.s32.totalorder 2, %s19
      // Predicated region
      $region49: #{tpu_custom_call.1} parent=5 // pred_check
        %p409 = pneg %p408
      $region50: #{tpu_custom_call.1} parent=5 // pred_check_branch
        %411 = sbr.rel (%p409) target = $region52
      $region51: #{tpu_custom_call.1} parent=5 // pred_region
        %s412 = ssub.s32 %s19, 2
        // Predicated region
        $region53: #{tpu_custom_call.1} parent=51 // pred_check
          %p413 = pneg %p174
        $region54: #{tpu_custom_call.1} parent=51 // pred_check_branch
          %415 = sbr.rel (%p413) target = $region56
        $region55: #{tpu_custom_call.1} parent=51 // pred_region
          %s416 = sand.u32 %s159, 1
          %s417 = scalar_lea.sflag [#allocation5], %s416
          %s418 = sand.u32 %s159, 1
          %s419 = smul.addr %s418, 32
          %s420 = scalar_lea.vmem [#allocation6], %s419
          %421 = dma.done %s417, 512
        $region56: #{tpu_custom_call.1} parent=51 // pred_fallthru
          _
      $region52: #{tpu_custom_call.1} parent=5 // pred_fallthru
        _
    $region6: #{tpu_custom_call.1} parent=1 // loop_footer
      %s23 = sadd.s32 1, %s19
    $region7: #{tpu_custom_call.1} parent=1 // loop_footer_branch
      %18 = sbr.rel target = $region3
    $region8: #{tpu_custom_call.1} parent=1 // loop_exit
      _
    %422 = vsyncpa [#allocation4], 1
    %s423 = scalar_lea.sflag [#allocation4], 1
    %424 = vsyncpa %s423, 1
    %425 = vsyncpa [#allocation5], 1
    %s426 = scalar_lea.sflag [#allocation5], 1
    %427 = vsyncpa %s426, 1

</llo_original>
